<compile_context>
chip_gen: v7x
topology: tpu7x:2x2x1
jax: 0.10.0
libtpu: 0.0.40
codegen_flags: <defaults>
</compile_context>

<pallas_src>
import functools
import math

import jax
import jax.numpy as jnp
from jax import lax
from jax.experimental import pallas as pl
from jax.experimental.pallas import tpu as pltpu

LANES = 128
TARGET_BLOCK_BYTES = 1 << 20          # ~1 MiB per input block per step
VMEM_LIMIT_BYTES = 32 * 1024 * 1024   # explicit: v5e scoped default is 16 MiB


def _sublane_multiple(dtype) -> int:
    # Minimum second-minor granularity per element width (f32:8, bf16:16, i8:32).
    return {4: 8, 2: 16, 1: 32}.get(jnp.dtype(dtype).itemsize, 8)


def _iou_kernel(x_ref, y_ref, o_i_ref, o_t_ref, acc_i_ref, acc_t_ref, *,
                fold_rows, chunks, unroll):
    step = pl.program_id(1)

    @pl.when(step == 0)
    def _():
        acc_i_ref[...] = jnp.zeros_like(acc_i_ref)
        acc_t_ref[...] = jnp.zeros_like(acc_t_ref)

    def body(c, carry):
        acc_i, acc_t = carry
        r = pl.multiple_of(c * fold_rows, fold_rows)
        xb = x_ref[pl.ds(r, fold_rows), :].astype(jnp.float32)
        yb = y_ref[pl.ds(r, fold_rows), :].astype(jnp.float32)
        # Fused: each chunk of x and y is loaded once and feeds both sums.
        return acc_i + xb * yb, acc_t + (xb + yb)

    acc_i, acc_t = lax.fori_loop(
        0, chunks, body, (acc_i_ref[...], acc_t_ref[...]), unroll=unroll)
    acc_i_ref[...] = acc_i
    acc_t_ref[...] = acc_t

    @pl.when(step == pl.num_programs(1) - 1)
    def _():
        # Per-shard partial accumulators; the tiny cross-lane reduction and the
        # combine across shards happen in plain JAX outside the kernel.
        o_i_ref[0] = acc_i
        o_t_ref[0] = acc_t


def iou_pallas(inputs, targets, smooth=1.0):
    """IoU = (sum(x*y) + smooth) / (sum(x+y) - sum(x*y) + smooth)."""
    x = jnp.ravel(inputs)
    y = jnp.ravel(targets)
    n = x.shape[0]

    rows = n // LANES

    sub = max(_sublane_multiple(x.dtype), _sublane_multiple(y.dtype))
    itemsize = max(jnp.dtype(x.dtype).itemsize, jnp.dtype(y.dtype).itemsize)
    # Keep bytes per block ~constant across dtypes (2048 rows f32, 4096 bf16, ...).
    tile_rows_pref = max(32, (TARGET_BLOCK_BYTES // (LANES * itemsize)) // 32 * 32)

    if rows >= tile_rows_pref:
        tile_rows = tile_rows_pref
    else:
        tile_rows = (rows // sub) * sub   # one whole (sublane-aligned) tile or nothing

    if tile_rows > 0:
        steps_total = rows // tile_rows
        # 2-way split feeds both TensorCores on v7x; harmless (serial) on 1-TC chips.
        num_shards = 2 if steps_total >= 2 else 1
        steps_per_shard = steps_total // num_shards
        rows_kernel = num_shards * steps_per_shard * tile_rows
    else:
        num_shards = 1
        steps_per_shard = 0
        rows_kernel = 0

    n_kernel = rows_kernel * LANES

    # Ragged remainder (partial tile + sub-128 tail): plain JAX.  Bounded by
    # ~num_shards*tile_rows rows, so it is negligible at streaming sizes and
    # removes every mask op from the kernel hot loop.
    if n_kernel < n:
        xt = x[n_kernel:].astype(jnp.float32)
        yt = y[n_kernel:].astype(jnp.float32)
        tail_inter = jnp.sum(xt * yt)
        tail_total = jnp.sum(xt) + jnp.sum(yt)
    else:
        tail_inter = jnp.float32(0.0)
        tail_total = jnp.float32(0.0)

    if rows_kernel == 0:
        inter = tail_inter
        total = tail_total
    else:
        fold_rows = math.gcd(tile_rows, 32)   # >= sublane multiple, divides tile_rows
        chunks = tile_rows // fold_rows
        unroll = chunks if chunks <= 8 else 8

        x2 = x[:n_kernel].reshape(rows_kernel, LANES)
        y2 = y[:n_kernel].reshape(rows_kernel, LANES)

        def in_map(s, i):
            return (s * steps_per_shard + i, 0)

        # Deeper input buffering only pays once the per-shard grid is long.
        if steps_per_shard >= 3:
            in_spec = pl.BlockSpec((tile_rows, LANES), in_map,
                                   pipeline_mode=pl.Buffered(3))
        else:
            in_spec = pl.BlockSpec((tile_rows, LANES), in_map)

        kernel = functools.partial(
            _iou_kernel, fold_rows=fold_rows, chunks=chunks, unroll=unroll)

        out_i, out_t = pl.pallas_call(
            kernel,
            out_shape=(
                jax.ShapeDtypeStruct((num_shards, fold_rows, LANES), jnp.float32),
                jax.ShapeDtypeStruct((num_shards, fold_rows, LANES), jnp.float32),
            ),
            grid_spec=pltpu.PrefetchScalarGridSpec(
                num_scalar_prefetch=0,
                grid=(num_shards, steps_per_shard),
                in_specs=[in_spec, in_spec],
                out_specs=[
                    pl.BlockSpec((1, fold_rows, LANES), lambda s, i: (s, 0, 0)),
                    pl.BlockSpec((1, fold_rows, LANES), lambda s, i: (s, 0, 0)),
                ],
                scratch_shapes=[
                    pltpu.VMEM((fold_rows, LANES), jnp.float32),  # intersection acc
                    pltpu.VMEM((fold_rows, LANES), jnp.float32),  # total acc
                ],
            ),
            compiler_params=pltpu.CompilerParams(
                dimension_semantics=("parallel", "arbitrary"),
                vmem_limit_bytes=VMEM_LIMIT_BYTES,
            ),
        )(x2, y2)

        inter = jnp.sum(out_i) + tail_inter
        total = jnp.sum(out_t) + tail_total

    smooth = jnp.float32(smooth)
    union = total - inter
    return (inter + smooth) / (union + smooth)


def iou_ref(inputs, targets, smooth=1.0):
    x = jnp.ravel(inputs).astype(jnp.float32)
    y = jnp.ravel(targets).astype(jnp.float32)
    inter = jnp.sum(x * y)
    total = jnp.sum(x + y)
    union = total - inter
    return (inter + smooth) / (union + smooth)


def _check(shape, key, rtol):
    k1, k2 = jax.random.split(key)
    inputs = jax.nn.sigmoid(jax.random.normal(k1, shape, jnp.float32))
    targets = (jax.random.uniform(k2, shape) > 0.5).astype(jnp.float32)
    result = jax.block_until_ready(iou_pallas(inputs, targets, smooth=1.0))
    expected = iou_ref(inputs, targets, smooth=1.0)
    assert jnp.allclose(result, expected, rtol=rtol, atol=rtol), (
        shape, result, expected)


if __name__ == "__main__":
    key = jax.random.PRNGKey(0)
    k1, k2, k3 = jax.random.split(key, 3)

    # Primary case (matches module usage, segmentation-style NCHW): single tile.
    _check((2, 4, 16, 16), k1, rtol=1e-5)

    # Ragged case: partial tile + sub-128 tail folded into the JAX-side tail.
    _check((2, 3, 300, 200), k2, rtol=1e-4)

    # Streaming case: 2-way core split, multi-step accumulation per shard,
    # 3-deep input buffering, plus a ragged JAX tail.
    _check((2, 4, 448, 448), k3, rtol=3e-4)

    print("KERNEL_OK")
</pallas_src>

<mosaic_0001>
module attributes {stable_mosaic.version = 11 : i64} {
  func.func @_iou_kernel(%arg0: i32, %arg1: i32, %arg2: memref<16x128xf32, #tpu.memory_space<vmem>>, %arg3: memref<16x128xf32, #tpu.memory_space<vmem>>, %arg4: memref<1x16x128xf32, #tpu.memory_space<vmem>>, %arg5: memref<1x16x128xf32, #tpu.memory_space<vmem>>, %arg6: memref<16x128xf32, #tpu.memory_space<vmem>>, %arg7: memref<16x128xf32, #tpu.memory_space<vmem>>) attributes {dimension_semantics = [#tpu.dimension_semantics<parallel>, #tpu.dimension_semantics<arbitrary>], iteration_bounds = array<i64: 1, 1>, scalar_prefetch = 0 : i64, scratch_operands = 2 : i64, tpu.core_type = #tpu.core_type<tc>, window_params = [{transform_indices = @transform_0, window_bounds = array<i64: 16, 128>}, {transform_indices = @transform_1, window_bounds = array<i64: 16, 128>}, {transform_indices = @transform_2, window_bounds = array<i64: 1, 16, 128>}, {transform_indices = @transform_3, window_bounds = array<i64: 1, 16, 128>}]} {
    %c0_i32 = arith.constant 0 : i32
    %0 = arith.cmpi eq, %arg1, %c0_i32 : i32
    %1 = arith.extui %0 : i1 to i32
    %c0_i32_0 = arith.constant 0 : i32
    %2 = arith.cmpi ne, %1, %c0_i32_0 : i32
    scf.if %2 {
      %cst = arith.constant 0.000000e+00 : f32
      %20 = vector.broadcast %cst : f32 to vector<16x128xf32>
      %c0_13 = arith.constant 0 : index
      %c0_14 = arith.constant 0 : index
      %21 = vector.load %arg6[%c0_13, %c0_14] : memref<16x128xf32, #tpu.memory_space<vmem>>, vector<16x128xf32>
      tpu.vector_store %arg6[%c0_13, %c0_14], %20 {strides = array<i32>} : memref<16x128xf32, #tpu.memory_space<vmem>>, vector<16x128xf32>,
      %cst_15 = arith.constant 0.000000e+00 : f32
      %22 = vector.broadcast %cst_15 : f32 to vector<16x128xf32>
      %c0_16 = arith.constant 0 : index
      %c0_17 = arith.constant 0 : index
      %23 = vector.load %arg7[%c0_16, %c0_17] : memref<16x128xf32, #tpu.memory_space<vmem>>, vector<16x128xf32>
      tpu.vector_store %arg7[%c0_16, %c0_17], %22 {strides = array<i32>} : memref<16x128xf32, #tpu.memory_space<vmem>>, vector<16x128xf32>,
    } else {
    }
    %c0 = arith.constant 0 : index
    %c0_1 = arith.constant 0 : index
    %3 = vector.load %arg6[%c0, %c0_1] : memref<16x128xf32, #tpu.memory_space<vmem>>, vector<16x128xf32>
    %c0_2 = arith.constant 0 : index
    %c0_3 = arith.constant 0 : index
    %4 = vector.load %arg7[%c0_2, %c0_3] : memref<16x128xf32, #tpu.memory_space<vmem>>, vector<16x128xf32>
    %c0_i32_4 = arith.constant 0 : i32
    %c16_i32 = arith.constant 16 : i32
    %5 = arith.muli %c0_i32_4, %c16_i32 : i32
    %6 = tpu.assume_multiple %5, 16 : i32
    %7 = arith.index_cast %6 : i32 to index
    %c0_5 = arith.constant 0 : index
    %8 = vector.load %arg2[%7, %c0_5] : memref<16x128xf32, #tpu.memory_space<vmem>>, vector<16x128xf32>
    %9 = arith.index_cast %6 : i32 to index
    %c0_6 = arith.constant 0 : index
    %10 = vector.load %arg3[%9, %c0_6] : memref<16x128xf32, #tpu.memory_space<vmem>>, vector<16x128xf32>
    %11 = arith.mulf %8, %10 : vector<16x128xf32>
    %12 = arith.addf %3, %11 : vector<16x128xf32>
    %13 = arith.addf %8, %10 : vector<16x128xf32>
    %14 = arith.addf %4, %13 : vector<16x128xf32>
    %c1_i32 = arith.constant 1 : i32
    %c0_7 = arith.constant 0 : index
    %c0_8 = arith.constant 0 : index
    %15 = vector.load %arg6[%c0_7, %c0_8] : memref<16x128xf32, #tpu.memory_space<vmem>>, vector<16x128xf32>
    tpu.vector_store %arg6[%c0_7, %c0_8], %12 {strides = array<i32>} : memref<16x128xf32, #tpu.memory_space<vmem>>, vector<16x128xf32>,
    %c0_9 = arith.constant 0 : index
    %c0_10 = arith.constant 0 : index
    %16 = vector.load %arg7[%c0_9, %c0_10] : memref<16x128xf32, #tpu.memory_space<vmem>>, vector<16x128xf32>
    tpu.vector_store %arg7[%c0_9, %c0_10], %14 {strides = array<i32>} : memref<16x128xf32, #tpu.memory_space<vmem>>, vector<16x128xf32>,
    %c0_i32_11 = arith.constant 0 : i32
    %17 = arith.cmpi eq, %arg1, %c0_i32_11 : i32
    %18 = arith.extui %17 : i1 to i32
    %c0_i32_12 = arith.constant 0 : i32
    %19 = arith.cmpi ne, %18, %c0_i32_12 : i32
    scf.if %19 {
      %c0_13 = arith.constant 0 : index
      %c0_14 = arith.constant 0 : index
      %c0_15 = arith.constant 0 : index
      %20 = vector.load %arg4[%c0_13, %c0_14, %c0_15] : memref<1x16x128xf32, #tpu.memory_space<vmem>>, vector<1x16x128xf32>
      %21 = vector.shape_cast %20 : vector<1x16x128xf32> to vector<16x128xf32>
      %22 = vector.shape_cast %12 : vector<16x128xf32> to vector<1x16x128xf32>
      tpu.vector_store %arg4[%c0_13, %c0_14, %c0_15], %22 {strides = array<i32>} : memref<1x16x128xf32, #tpu.memory_space<vmem>>, vector<1x16x128xf32>,
      %c0_16 = arith.constant 0 : index
      %c0_17 = arith.constant 0 : index
      %c0_18 = arith.constant 0 : index
      %23 = vector.load %arg5[%c0_16, %c0_17, %c0_18] : memref<1x16x128xf32, #tpu.memory_space<vmem>>, vector<1x16x128xf32>
      %24 = vector.shape_cast %23 : vector<1x16x128xf32> to vector<16x128xf32>
      %25 = vector.shape_cast %14 : vector<16x128xf32> to vector<1x16x128xf32>
      tpu.vector_store %arg5[%c0_16, %c0_17, %c0_18], %25 {strides = array<i32>} : memref<1x16x128xf32, #tpu.memory_space<vmem>>, vector<1x16x128xf32>,
    } else {
    }
    return
  }
  func.func @transform_0(%arg0: i32, %arg1: i32) -> (i32, i32) {
    %c1_i32 = arith.constant 1 : i32
    %0 = arith.muli %arg0, %c1_i32 : i32
    %1 = arith.addi %0, %arg1 : i32
    %c0_i32 = arith.constant 0 : i32
    %c0_i32_0 = arith.constant 0 : i32
    return %1, %c0_i32 : i32, i32
  }
  func.func @transform_1(%arg0: i32, %arg1: i32) -> (i32, i32) {
    %c1_i32 = arith.constant 1 : i32
    %0 = arith.muli %arg0, %c1_i32 : i32
    %1 = arith.addi %0, %arg1 : i32
    %c0_i32 = arith.constant 0 : i32
    %c0_i32_0 = arith.constant 0 : i32
    return %1, %c0_i32 : i32, i32
  }
  func.func @transform_2(%arg0: i32, %arg1: i32) -> (i32, i32, i32) {
    %c0_i32 = arith.constant 0 : i32
    %c0_i32_0 = arith.constant 0 : i32
    %c0_i32_1 = arith.constant 0 : i32
    return %arg0, %c0_i32, %c0_i32_0 : i32, i32, i32
  }
  func.func @transform_3(%arg0: i32, %arg1: i32) -> (i32, i32, i32) {
    %c0_i32 = arith.constant 0 : i32
    %c0_i32_0 = arith.constant 0 : i32
    %c0_i32_1 = arith.constant 0 : i32
    return %arg0, %c0_i32, %c0_i32_0 : i32, i32, i32
  }
}

</mosaic_0001>

<llo_original>
// kernel: tpu_custom_call.1
$region0: #{tpu_custom_call.1}
  #allocation0 [shape = 'u32[]', space=smem, size = 0x4, offset = 0x4, fixed_abs, tag = 'smem constant byte address 0x4 - core index']
  #allocation1 [shape = 'u32[144,128]{1,0:T(1,128)}', space=vmem, size = 0x12000, scoped, tag = 'internal scratch']
  #allocation2 [shape = 'f32[16,128]{1,0:T(8,128)}', space=vmem, size = 0x2000, scoped, tag = 'scratch operand']
  #allocation3 [shape = 'f32[16,128]{1,0:T(8,128)}', space=vmem, size = 0x2000, scoped, tag = 'scratch operand']
  %s0 = inlined_call_operand.hbm [shape: f32[16,128], index: 0, kind: input, shape index: {}]
  %s1 = inlined_call_operand.hbm [shape: f32[16,128], index: 1, kind: input, shape index: {}]
  %s2 = inlined_call_operand.hbm [shape: f32[1,16,128], index: 2, kind: output, shape index: {0}]
  %s3 = inlined_call_operand.hbm [shape: f32[1,16,128], index: 3, kind: output, shape index: {1}]
  %4 = xla_tuple %s2, %s3
  %s5 = sld [smem:[#allocation0]]
  $region42: #{tpu_custom_call.1} parent=0
    _
  %s7 = ssub.s32 1, %s5
  %s8 = scalar_select 0, %s7, %s5
  $region1: #{tpu_custom_call.1} parent=0
    #allocation4 [shape = 'u8[8192]{0}', space=vmem, size = 0x2000, scoped, tag = 'input window, operand 0, single buffered']
    #allocation5 [shape = 's32[1]{0}', space=sflag, size = 0x4, scoped, tag = 'scoped memory for tpu_custom_call.1']
    #allocation6 [shape = 's32[1]{0}', space=sflag, size = 0x4, scoped, tag = 'scoped memory for tpu_custom_call.1']
    #allocation7 [shape = 'u8[8192]{0}', space=vmem, size = 0x2000, scoped, tag = 'input window, operand 1, single buffered']
    #allocation8 [shape = 's32[1]{0}', space=sflag, size = 0x4, scoped, tag = 'scoped memory for tpu_custom_call.1']
    #allocation9 [shape = 'u8[8192]{0}', space=vmem, size = 0x2000, scoped, tag = 'output window, operand 0, single buffered']
    #allocation10 [shape = 'u8[8192]{0}', space=vmem, size = 0x2000, scoped, tag = 'output window, operand 1, single buffered']
    #allocation11 [shape = 's32[1]{0}', space=sflag, size = 0x4, scoped, tag = 'scoped memory for tpu_custom_call.1']
    %9 = vsyncpa [#allocation5], 0
    %10 = vsyncpa [#allocation8], 0
    %11 = vsyncpa [#allocation6], 0
    %12 = vsyncpa [#allocation11], 0
    // Predicated region
    $region2: #{tpu_custom_call.1} parent=1 // pred_check
      _
    $region3: #{tpu_custom_call.1} parent=1 // pred_check_branch
      %14 = sbr.rel (0) target = $region5
    $region4: #{tpu_custom_call.1} parent=1 // pred_region
      %s15 = sadd.s32 0, 0
      %s16 = smul.u32 2, %s15
      %s18 = ssub.s32 256, 256
      %19 = vsyncadd [#allocation5], %s18
      %s20 = smul.addr %s16, 128
      %s21 = scalar_lea.hbm %s0, %s20
      %s22 = sshll.u32 [#allocation4], 4
      %s23 = int_to_ptr.vmem [resolvable:$true] %s22
      %28 = dma.hbm_to_vmem [thread:$0]  %s21, 256, %s23, [#allocation5], 128, 128, 8
    $region5: #{tpu_custom_call.1} parent=1 // pred_fallthru
      _
    // Predicated region
    $region6: #{tpu_custom_call.1} parent=1 // pred_check
      _
    $region7: #{tpu_custom_call.1} parent=1 // pred_check_branch
      %30 = sbr.rel (0) target = $region9
    $region8: #{tpu_custom_call.1} parent=1 // pred_region
      %s31 = sadd.s32 0, 0
      %s32 = smul.u32 2, %s31
      %s34 = ssub.s32 256, 256
      %35 = vsyncadd [#allocation8], %s34
      %s36 = smul.addr %s32, 128
      %s37 = scalar_lea.hbm %s1, %s36
      %s38 = sshll.u32 [#allocation7], 4
      %s39 = int_to_ptr.vmem [resolvable:$true] %s38
      %44 = dma.hbm_to_vmem [thread:$0]  %s37, 256, %s39, [#allocation8], 128, 128, 8
    $region9: #{tpu_custom_call.1} parent=1 // pred_fallthru
      _
    // Predicated region
    $region10: #{tpu_custom_call.1} parent=1 // pred_check
      _
    $region11: #{tpu_custom_call.1} parent=1 // pred_check_branch
      %46 = sbr.rel (0) target = $region13
    $region12: #{tpu_custom_call.1} parent=1 // pred_region
      %47 = dma.done [#allocation5], 256
    $region13: #{tpu_custom_call.1} parent=1 // pred_fallthru
      _
    // Predicated region
    $region14: #{tpu_custom_call.1} parent=1 // pred_check
      _
    $region15: #{tpu_custom_call.1} parent=1 // pred_check_branch
      %49 = sbr.rel (0) target = $region17
    $region16: #{tpu_custom_call.1} parent=1 // pred_region
      %50 = dma.done [#allocation8], 256
    $region17: #{tpu_custom_call.1} parent=1 // pred_fallthru
      _
    %s51 = sadd.s32 0, 0
    %s52 = smul.u32 2, %s51
    %s53 = sadd.s32 0, 0
    %s54 = smul.u32 2, %s53
    %p55 = scmp.eq.s32.totalorder 0, 0
    // Predicated region
    $region18: #{tpu_custom_call.1} parent=1 // pred_check
      %p56 = pneg %p55
    $region19: #{tpu_custom_call.1} parent=1 // pred_check_branch
      %58 = sbr.rel (%p56) target = $region21
    $region20: #{tpu_custom_call.1} parent=1 // pred_region
      %59 = vst [vmem:[#allocation2] sm:$0xff] 0.0
      %60 = vst [vmem:[#allocation2 + $0x8] sm:$0xff] 0.0
      %61 = vst [vmem:[#allocation3] sm:$0xff] 0.0
      %62 = vst [vmem:[#allocation3 + $0x8] sm:$0xff] 0.0
    $region21: #{tpu_custom_call.1} parent=1 // pred_fallthru
      _
    %v63 = vld [vmem:[#allocation2] sm:$0xff]
    %v64 = vld [vmem:[#allocation2 + $0x8] sm:$0xff]
    %v65 = vld [vmem:[#allocation3] sm:$0xff]
    %v66 = vld [vmem:[#allocation3 + $0x8] sm:$0xff]
    %v67 = vld [vmem:[#allocation4] sm:$0xff]
    %v68 = vld [vmem:[#allocation4 + $0x8] sm:$0xff]
    %v69 = vld [vmem:[#allocation7] sm:$0xff]
    %v70 = vld [vmem:[#allocation7 + $0x8] sm:$0xff]
    %v71 = vmul.f32 %v67, %v69
    %v72 = vmul.f32 %v68, %v70
    %v73 = vadd.f32 %v63, %v71
    %v74 = vadd.f32 %v64, %v72
    %v75 = vadd.f32 %v67, %v69
    %v76 = vadd.f32 %v68, %v70
    %v77 = vadd.f32 %v65, %v75
    %v78 = vadd.f32 %v66, %v76
    %79 = vst [vmem:[#allocation2] sm:$0xff] %v73
    %80 = vst [vmem:[#allocation2 + $0x8] sm:$0xff] %v74
    %81 = vst [vmem:[#allocation3] sm:$0xff] %v77
    %82 = vst [vmem:[#allocation3 + $0x8] sm:$0xff] %v78
    // Predicated region
    $region22: #{tpu_custom_call.1} parent=1 // pred_check
      %p83 = pneg %p55
    $region23: #{tpu_custom_call.1} parent=1 // pred_check_branch
      %85 = sbr.rel (%p83) target = $region25
    $region24: #{tpu_custom_call.1} parent=1 // pred_region
      %86 = vst [vmem:[#allocation9] sm:$0xff] %v73
      %87 = vst [vmem:[#allocation9 + $0x8] sm:$0xff] %v74
      %88 = vst [vmem:[#allocation10] sm:$0xff] %v77
      %89 = vst [vmem:[#allocation10 + $0x8] sm:$0xff] %v78
    $region25: #{tpu_custom_call.1} parent=1 // pred_fallthru
      _
    // Predicated region
    $region26: #{tpu_custom_call.1} parent=1 // pred_check
      _
    $region27: #{tpu_custom_call.1} parent=1 // pred_check_branch
      %91 = sbr.rel (0) target = $region29
    $region28: #{tpu_custom_call.1} parent=1 // pred_region
      %s93 = ssub.s32 256, 256
      %94 = vsyncadd [#allocation6], %s93
      %s95 = sshll.u32 [#allocation9], 4
      %s96 = int_to_ptr.vmem [resolvable:$true] %s95
      %101 = dma.vmem_to_hbm [thread:$0]  %s96, 256, %s2, [#allocation6], 128, 128, 8
    $region29: #{tpu_custom_call.1} parent=1 // pred_fallthru
      _
    // Predicated region
    $region30: #{tpu_custom_call.1} parent=1 // pred_check
      _
    $region31: #{tpu_custom_call.1} parent=1 // pred_check_branch
      %103 = sbr.rel (0) target = $region33
    $region32: #{tpu_custom_call.1} parent=1 // pred_region
      %s105 = ssub.s32 256, 256
      %106 = vsyncadd [#allocation11], %s105
      %s107 = sshll.u32 [#allocation10], 4
      %s108 = int_to_ptr.vmem [resolvable:$true] %s107
      %113 = dma.vmem_to_hbm [thread:$0]  %s108, 256, %s3, [#allocation11], 128, 128, 8
    $region33: #{tpu_custom_call.1} parent=1 // pred_fallthru
      _
    // Predicated region
    $region34: #{tpu_custom_call.1} parent=1 // pred_check
      _
    $region35: #{tpu_custom_call.1} parent=1 // pred_check_branch
      %115 = sbr.rel (0) target = $region37
    $region36: #{tpu_custom_call.1} parent=1 // pred_region
      %116 = dma.done [#allocation6], 256
    $region37: #{tpu_custom_call.1} parent=1 // pred_fallthru
      _
    // Predicated region
    $region38: #{tpu_custom_call.1} parent=1 // pred_check
      _
    $region39: #{tpu_custom_call.1} parent=1 // pred_check_branch
      %118 = sbr.rel (0) target = $region41
    $region40: #{tpu_custom_call.1} parent=1 // pred_region
      %119 = dma.done [#allocation11], 256
    $region41: #{tpu_custom_call.1} parent=1 // pred_fallthru
      _
    %120 = vsyncpa [#allocation5], 1
    %121 = vsyncpa [#allocation8], 1
    %122 = vsyncpa [#allocation6], 1
    %123 = vsyncpa [#allocation11], 1

</llo_original>
